<compile_context>
chip_gen: v5e
topology: v5e:2x2
jax: 0.10.0
libtpu: 0.0.40
codegen_flags: <defaults>
</compile_context>

<pallas_src>
import functools

import jax
import jax.numpy as jnp
from jax.experimental import pallas as pl
from jax.experimental.pallas import tpu as pltpu


def _cdiv(a, b):
    return -(-a // b)


def _vmem_capacity_bytes():
    """Generation-aware VMEM size (v5e/v6e: 128 MiB, v7x: 64 MiB)."""
    try:
        return int(pltpu.get_tpu_info().vmem_capacity_bytes)
    except Exception:
        return 128 << 20


def _pick_spatial_tile(spatial, n_classes, elem_bytes, vmem_cap,
                       max_lanes=1 << 17):
    """Largest multiple-of-128 lane tile with ~4 MiB logits per block."""
    if spatial <= 128:
        return spatial                      # equal to full dim -> always legal
    # ~4 MiB blocks hit the ~85%+ of-HBM-roofline regime; scale down if VMEM
    # is tight (v7x 64 MiB/TC).
    target_block_bytes = max(1 << 20, min(4 << 20, vmem_cap // 16))
    cap = (target_block_bytes // (elem_bytes * n_classes)) // 128 * 128
    cap = max(128, min(max_lanes, cap))
    return min(cap, (spatial // 128) * 128)


def _focal_loss_kernel(x_ref, t_ref, out_ref, acc_ref, *,
                       gamma, ignore_index, spatial_size, tile_spatial,
                       gs_inner, tiles_in_grid):
    """One (batch image, spatial-outer, spatial-inner) block.

    x_ref  : (1, C, TS)  logits tile  -- classes on sublanes, spatial on lanes
    t_ref  : (1, 1, TS)  int32 targets
    out_ref: (1, 1, OW)  folded per-lane partial sums for this (b, outer) group
    acc_ref: (1, TS)     f32 VMEM accumulator across inner spatial tiles
    """
    o = pl.program_id(1)
    i = pl.program_id(2)
    ts = tile_spatial
    si = o * gs_inner + i                    # global spatial tile index

    @pl.when(i == 0)
    def _():
        acc_ref[...] = jnp.zeros_like(acc_ref)

    x = x_ref[0].astype(jnp.float32)          # (C, TS) -- upcast in VMEM
    t = t_ref[0]                              # (1, TS) int32

    # target = target * (target != ignore_index)  (kvt semantics: remap to 0)
    t = t * (t != ignore_index).astype(t.dtype)

    # log_softmax over the class (sublane) axis, numerically stable.
    m = jnp.max(x, axis=0, keepdims=True)                              # (1, TS)
    lse = m + jnp.log(jnp.sum(jnp.exp(x - m), axis=0, keepdims=True))  # (1, TS)

    # Gather the target-class logit via a one-hot mask over the class axis.
    cls = jax.lax.broadcasted_iota(jnp.int32, x.shape, 0)              # (C, TS)
    x_t = jnp.sum(jnp.where(cls == t, x, jnp.float32(0.0)),
                  axis=0, keepdims=True)                               # (1, TS)

    logpt = x_t - lse                                                  # (1, TS)

    # gamma is a trace-time Python constant: specialize.
    if gamma == 0.0:
        loss = -logpt                              # (1-pt)**0 == 1
    else:
        pt = jnp.exp(logpt)
        base = jnp.float32(1.0) - pt
        gi = int(gamma)
        if float(gi) == float(gamma) and 0 < gi <= 8:
            w = base
            for _ in range(gi - 1):                # VPU multiplies, no pow
                w = w * base
        else:
            # Clamp: pt can exceed 1.0 by an ulp; pow(negative, float) NaNs.
            w = jnp.maximum(base, jnp.float32(0.0)) ** jnp.float32(gamma)
        loss = -w * logpt

    # Accumulate.  Only padded tiles (ragged tail / over-provisioned grid)
    # pay for the validity mask; full tiles take a plain add.
    full_tiles = spatial_size // ts              # static: tiles with no padding
    if tiles_in_grid * ts > spatial_size:        # static: some tile is padded
        @pl.when(si < full_tiles)
        def _():
            acc_ref[...] += loss

        @pl.when(si >= full_tiles)
        def _():
            col = jax.lax.broadcasted_iota(jnp.int32, (1, ts), 1)
            valid = (si * ts + col) < spatial_size
            acc_ref[...] += jnp.where(valid, loss, jnp.float32(0.0))
    else:
        acc_ref[...] += loss

    # Last inner step: fold (1, TS) down to (1, 128) with lane-aligned
    # 128-wide slice adds (pure VALU, no relayout) and store lane-dense.
    @pl.when(i == gs_inner - 1)
    def _():
        a = acc_ref[...]
        if ts % 128 == 0 and ts > 128:
            chunks = [a[:, j * 128:(j + 1) * 128] for j in range(ts // 128)]
            while len(chunks) > 1:                 # balanced add tree
                nxt = [chunks[k] + chunks[k + 1]
                       for k in range(0, len(chunks) - 1, 2)]
                if len(chunks) % 2 == 1:
                    nxt.append(chunks[-1])
                chunks = nxt
            out_ref[0] = chunks[0]
        else:
            out_ref[0] = a


def focal_loss(logits, target, *, gamma=0.0, size_average=True,
               ignore_index=-100, tile_spatial=None):
    """Focal loss matching kvt FocalLoss.forward (alpha=None).

    logits: (N, C, H, W) (or any (N, C, ...)) or (R, C) float array
            (f32 or bf16 -- bf16 halves HBM traffic; compute is f32 in VMEM).
    target: matching integer class-index array.
    Returns a float32 scalar.
    """
    if logits.ndim > 2:
        n, c = logits.shape[0], logits.shape[1]
        x = logits.reshape(n, c, -1)                    # (N, C, S): free reshape
        t = target.reshape(n, 1, -1).astype(jnp.int32)  # (N, 1, S)
    else:
        # TODO(synk): an (R, C)-native kernel (rows on sublanes, classes on
        # lanes) would avoid this extra XLA transpose (one full HBM RW).
        r, c = logits.shape
        x = jnp.transpose(logits).reshape(1, c, r)
        t = target.reshape(1, 1, r).astype(jnp.int32)

    n, c, s_total = x.shape
    assert t.shape == (n, 1, s_total)

    elem_bytes = jnp.dtype(x.dtype).itemsize
    vmem_cap = _vmem_capacity_bytes()

    ts = int(tile_spatial) if tile_spatial is not None else _pick_spatial_tile(
        s_total, c, elem_bytes, vmem_cap)
    gs_total = _cdiv(s_total, ts)                # real spatial tiles (cdiv)

    # Megacore (v7x has 2 TCs/chip): also split the spatial axis so N=1 /
    # small-N workloads use both cores.  Free on single-TC v5e/v6e.
    outer = 2 if gs_total >= 2 else 1
    gs_inner = _cdiv(gs_total, outer)
    gs_outer = _cdiv(gs_total, gs_inner)
    tiles_in_grid = gs_outer * gs_inner          # may exceed gs_total (masked)

    ow = 128 if (ts % 128 == 0 and ts > 128) else ts
    total_rows = n * s_total

    # Explicit VMEM budget: double-buffered logits + targets + out, plus the
    # f32 accumulator, plus slack; capped under the physical VMEM (v7x: 64 MiB).
    logit_block = c * ts * elem_bytes
    tgt_block = ts * 4
    out_block = ow * 4
    need = 2 * (logit_block + tgt_block + out_block) + ts * 4
    vmem_limit = max(16 << 20, int(1.5 * need) + (2 << 20))
    vmem_limit = min(vmem_limit, int(0.75 * vmem_cap))
    vmem_limit = max(vmem_limit, need + (2 << 20))

    kernel = functools.partial(
        _focal_loss_kernel,
        gamma=float(gamma),
        ignore_index=int(ignore_index),
        spatial_size=int(s_total),
        tile_spatial=int(ts),
        gs_inner=int(gs_inner),
        tiles_in_grid=int(tiles_in_grid),
    )

    def _spatial_idx(b, o, i):
        # Clamp: over-provisioned tiles re-read the last real block; their
        # contribution is masked to zero in-kernel.
        return (b, 0, jnp.minimum(o * gs_inner + i, gs_total - 1))

    partial_sums = pl.pallas_call(
        kernel,
        out_shape=jax.ShapeDtypeStruct((n, gs_outer, ow), jnp.float32),
        grid_spec=pltpu.PrefetchScalarGridSpec(
            num_scalar_prefetch=0,
            grid=(n, gs_outer, gs_inner),
            in_specs=[
                pl.BlockSpec((1, c, ts), _spatial_idx),
                pl.BlockSpec((1, 1, ts), _spatial_idx),
            ],
            out_specs=pl.BlockSpec((1, 1, ow), lambda b, o, i: (b, o, 0)),
            scratch_shapes=[pltpu.VMEM((1, ts), jnp.float32)],
        ),
        compiler_params=pltpu.CompilerParams(
            dimension_semantics=("parallel", "parallel", "arbitrary"),
            vmem_limit_bytes=int(vmem_limit)),
    )(x, t)

    total = jnp.sum(partial_sums)     # tiny (N, GS_OUTER, 128) reduce via XLA
    if size_average:
        return total / jnp.float32(total_rows)
    return total


def _reference_focal_loss(logits, target, *, gamma=0.0, size_average=True,
                          ignore_index=-100):
    if logits.ndim > 2:
        n, c = logits.shape[0], logits.shape[1]
        x = logits.reshape(n, c, -1).transpose(0, 2, 1).reshape(-1, c)
    else:
        x = logits
        c = x.shape[1]
    t = target.reshape(-1).astype(jnp.int32)
    t = t * (t != ignore_index).astype(jnp.int32)
    logp = jax.nn.log_softmax(x.astype(jnp.float32), axis=-1)
    logpt = jnp.take_along_axis(logp, t[:, None], axis=1)[:, 0]
    pt = jnp.exp(logpt)
    # Same clamp the kernel applies for non-integer gamma (robustness).
    base = jnp.maximum(1.0 - pt, 0.0)
    loss = -(base ** gamma) * logpt
    return loss.mean() if size_average else loss.sum()


if __name__ == "__main__":
    key = jax.random.PRNGKey(0)
    k1, k2, k3, k4 = jax.random.split(key, 4)

    # --- Segmentation-style path: (N, C, H, W) ----------------------------
    N, C, H, W = 2, 4, 16, 16
    logits = jax.random.normal(k1, (N, C, H, W), dtype=jnp.float32)
    target = jax.random.randint(k2, (N, H, W), minval=0, maxval=C,
                                dtype=jnp.int32)

    # gamma=2 exercises the (1 - pt)**gamma (integer-specialized) path.
    out = jax.block_until_ready(focal_loss(logits, target, gamma=2.0))
    ref = _reference_focal_loss(logits, target, gamma=2.0)
    assert jnp.allclose(out, ref, rtol=1e-5, atol=1e-5), (out, ref)

    # Default config (gamma=0) path.
    out0 = jax.block_until_ready(focal_loss(logits, target, gamma=0.0))
    ref0 = _reference_focal_loss(logits, target, gamma=0.0)
    assert jnp.allclose(out0, ref0, rtol=1e-5, atol=1e-5), (out0, ref0)

    # sum reduction path.
    outs = jax.block_until_ready(
        focal_loss(logits, target, gamma=2.0, size_average=False))
    refs = _reference_focal_loss(logits, target, gamma=2.0, size_average=False)
    assert jnp.allclose(outs, refs, rtol=1e-5, atol=1e-5), (outs, refs)

    # bf16 logits in HBM (kernel upcasts in VMEM; halves HBM traffic).
    logits_bf16 = logits.astype(jnp.bfloat16)
    outb = jax.block_until_ready(focal_loss(logits_bf16, target, gamma=2.0))
    refb = _reference_focal_loss(logits_bf16, target, gamma=2.0)
    assert jnp.allclose(outb, refb, rtol=1e-4, atol=1e-4), (outb, refb)

    # Multi-tile grid with ragged tail + ignore_index + non-integer gamma,
    # forcing the (outer, inner) spatial split and the masked-tail path.
    N2, C2, H2, W2 = 1, 3, 20, 20
    logits2 = jax.random.normal(k3, (N2, C2, H2, W2), dtype=jnp.float32)
    target2 = jax.random.randint(k4, (N2, H2, W2), minval=0, maxval=C2,
                                 dtype=jnp.int32)
    target2 = target2.at[0, :2, :3].set(-100)        # exercise ignore_index
    out2 = jax.block_until_ready(
        focal_loss(logits2, target2, gamma=2.5, tile_spatial=128))
    ref2 = _reference_focal_loss(logits2, target2, gamma=2.5)
    assert jnp.allclose(out2, ref2, rtol=1e-5, atol=1e-5), (out2, ref2)

    # 2-D classification path (R, C).
    logits3 = jax.random.normal(k3, (64, 10), dtype=jnp.float32)
    target3 = jax.random.randint(k4, (64,), minval=0, maxval=10,
                                 dtype=jnp.int32)
    out3 = jax.block_until_ready(focal_loss(logits3, target3, gamma=2.0))
    ref3 = _reference_focal_loss(logits3, target3, gamma=2.0)
    assert jnp.allclose(out3, ref3, rtol=1e-5, atol=1e-5), (out3, ref3)

    print("KERNEL_OK")
</pallas_src>

<mosaic_0001>
module attributes {stable_mosaic.version = 11 : i64} {
  func.func @_focal_loss_kernel(%arg0: i32, %arg1: i32, %arg2: i32, %arg3: memref<1x4x256xf32, #tpu.memory_space<vmem>>, %arg4: memref<1x1x256xi32, #tpu.memory_space<vmem>>, %arg5: memref<1x1x128xf32, #tpu.memory_space<vmem>>, %arg6: memref<1x256xf32, #tpu.memory_space<vmem>>) attributes {dimension_semantics = [#tpu.dimension_semantics<parallel>, #tpu.dimension_semantics<parallel>, #tpu.dimension_semantics<arbitrary>], iteration_bounds = array<i64: 2, 1, 1>, scalar_prefetch = 0 : i64, scratch_operands = 1 : i64, tpu.core_type = #tpu.core_type<tc>, window_params = [{transform_indices = @transform_0, window_bounds = array<i64: 1, 4, 256>}, {transform_indices = @transform_1, window_bounds = array<i64: 1, 1, 256>}, {transform_indices = @transform_2, window_bounds = array<i64: 1, 1, 128>}]} {
    %c0_i32 = arith.constant 0 : i32
    %0 = arith.cmpi eq, %arg2, %c0_i32 : i32
    %1 = arith.extui %0 : i1 to i32
    %c0_i32_0 = arith.constant 0 : i32
    %2 = arith.cmpi ne, %1, %c0_i32_0 : i32
    scf.if %2 {
      %cst_17 = arith.constant 0.000000e+00 : f32
      %41 = vector.broadcast %cst_17 : f32 to vector<1x256xf32>
      %c0_18 = arith.constant 0 : index
      %c0_19 = arith.constant 0 : index
      %42 = vector.load %arg6[%c0_18, %c0_19] : memref<1x256xf32, #tpu.memory_space<vmem>>, vector<1x256xf32>
      tpu.vector_store %arg6[%c0_18, %c0_19], %41 {strides = array<i32>} : memref<1x256xf32, #tpu.memory_space<vmem>>, vector<1x256xf32>,
    } else {
    }
    %c0 = arith.constant 0 : index
    %c0_1 = arith.constant 0 : index
    %c0_2 = arith.constant 0 : index
    %3 = vector.load %arg3[%c0, %c0_1, %c0_2] : memref<1x4x256xf32, #tpu.memory_space<vmem>>, vector<1x4x256xf32>
    %4 = vector.shape_cast %3 : vector<1x4x256xf32> to vector<4x256xf32>
    %c0_3 = arith.constant 0 : index
    %c0_4 = arith.constant 0 : index
    %c0_5 = arith.constant 0 : index
    %5 = vector.load %arg4[%c0_3, %c0_4, %c0_5] : memref<1x1x256xi32, #tpu.memory_space<vmem>>, vector<1x1x256xi32>
    %6 = vector.shape_cast %5 : vector<1x1x256xi32> to vector<1x256xi32>
    %c-100_i32 = arith.constant -100 : i32
    %7 = vector.broadcast %c-100_i32 : i32 to vector<1x256xi32>
    %8 = arith.cmpi ne, %6, %7 : vector<1x256xi32>
    %9 = arith.extui %8 : vector<1x256xi1> to vector<1x256xi32>
    %10 = arith.muli %6, %9 : vector<1x256xi32>
    %cst = arith.constant dense<0xFF800000> : vector<256xf32>
    %11 = vector.multi_reduction <maximumf>, %4, %cst [0] : vector<4x256xf32> to vector<256xf32>
    %12 = vector.shape_cast %11 : vector<256xf32> to vector<1x256xf32>
    %13 = vector.broadcast %12 : vector<1x256xf32> to vector<4x256xf32>
    %14 = arith.subf %4, %13 : vector<4x256xf32>
    %15 = math.exp %14 : vector<4x256xf32>
    %cst_6 = arith.constant dense<0.000000e+00> : vector<256xf32>
    %16 = vector.multi_reduction <add>, %15, %cst_6 [0] : vector<4x256xf32> to vector<256xf32>
    %17 = vector.shape_cast %16 : vector<256xf32> to vector<1x256xf32>
    %18 = math.log %17 : vector<1x256xf32>
    %19 = arith.addf %12, %18 : vector<1x256xf32>
    %20 = tpu.iota {dimensions = array<i32: 0>} : vector<4x256xi32>
    %21 = vector.broadcast %10 : vector<1x256xi32> to vector<4x256xi32>
    %22 = arith.cmpi eq, %20, %21 : vector<4x256xi32>
    %cst_7 = arith.constant 0.000000e+00 : f32
    %23 = vector.broadcast %cst_7 : f32 to vector<4x256xf32>
    %24 = arith.select %22, %4, %23 : vector<4x256xi1>, vector<4x256xf32>
    %cst_8 = arith.constant dense<0.000000e+00> : vector<256xf32>
    %25 = vector.multi_reduction <add>, %24, %cst_8 [0] : vector<4x256xf32> to vector<256xf32>
    %26 = vector.shape_cast %25 : vector<256xf32> to vector<1x256xf32>
    %27 = arith.subf %26, %19 : vector<1x256xf32>
    %28 = math.exp %27 : vector<1x256xf32>
    %cst_9 = arith.constant 1.000000e+00 : f32
    %29 = vector.broadcast %cst_9 : f32 to vector<1x256xf32>
    %30 = arith.subf %29, %28 : vector<1x256xf32>
    %31 = arith.mulf %30, %30 : vector<1x256xf32>
    %cst_10 = arith.constant 0.000000e+00 : f32
    %32 = vector.broadcast %cst_10 : f32 to vector<1x256xf32>
    %33 = arith.subf %32, %31 : vector<1x256xf32>
    %34 = arith.mulf %33, %27 : vector<1x256xf32>
    %c0_11 = arith.constant 0 : index
    %c0_12 = arith.constant 0 : index
    %35 = vector.load %arg6[%c0_11, %c0_12] : memref<1x256xf32, #tpu.memory_space<vmem>>, vector<1x256xf32>
    %36 = arith.addf %35, %34 : vector<1x256xf32>
    %c0_13 = arith.constant 0 : index
    %c0_14 = arith.constant 0 : index
    %37 = vector.load %arg6[%c0_13, %c0_14] : memref<1x256xf32, #tpu.memory_space<vmem>>, vector<1x256xf32>
    tpu.vector_store %arg6[%c0_13, %c0_14], %36 {strides = array<i32>} : memref<1x256xf32, #tpu.memory_space<vmem>>, vector<1x256xf32>,
    %c0_i32_15 = arith.constant 0 : i32
    %38 = arith.cmpi eq, %arg2, %c0_i32_15 : i32
    %39 = arith.extui %38 : i1 to i32
    %c0_i32_16 = arith.constant 0 : i32
    %40 = arith.cmpi ne, %39, %c0_i32_16 : i32
    scf.if %40 {
      %c0_17 = arith.constant 0 : index
      %c0_18 = arith.constant 0 : index
      %41 = vector.load %arg6[%c0_17, %c0_18] : memref<1x256xf32, #tpu.memory_space<vmem>>, vector<1x256xf32>
      %42 = vector.extract_strided_slice %41 {offsets = [0, 0], sizes = [1, 128], strides = [1, 1]} : vector<1x256xf32> to vector<1x128xf32>
      %43 = vector.extract_strided_slice %41 {offsets = [0, 128], sizes = [1, 128], strides = [1, 1]} : vector<1x256xf32> to vector<1x128xf32>
      %44 = arith.addf %42, %43 : vector<1x128xf32>
      %c0_19 = arith.constant 0 : index
      %c0_20 = arith.constant 0 : index
      %c0_21 = arith.constant 0 : index
      %45 = vector.load %arg5[%c0_19, %c0_20, %c0_21] : memref<1x1x128xf32, #tpu.memory_space<vmem>>, vector<1x1x128xf32>
      %46 = vector.shape_cast %45 : vector<1x1x128xf32> to vector<1x128xf32>
      %47 = vector.shape_cast %44 : vector<1x128xf32> to vector<1x1x128xf32>
      tpu.vector_store %arg5[%c0_19, %c0_20, %c0_21], %47 {strides = array<i32>} : memref<1x1x128xf32, #tpu.memory_space<vmem>>, vector<1x1x128xf32>,
    } else {
    }
    return
  }
  func.func @transform_0(%arg0: i32, %arg1: i32, %arg2: i32) -> (i32, i32, i32) {
    %c1_i32 = arith.constant 1 : i32
    %0 = arith.muli %arg1, %c1_i32 : i32
    %1 = arith.addi %0, %arg2 : i32
    %c0_i32 = arith.constant 0 : i32
    %2 = arith.minsi %1, %c0_i32 : i32
    %c0_i32_0 = arith.constant 0 : i32
    %c0_i32_1 = arith.constant 0 : i32
    return %arg0, %c0_i32_0, %2 : i32, i32, i32
  }
  func.func @transform_1(%arg0: i32, %arg1: i32, %arg2: i32) -> (i32, i32, i32) {
    %c1_i32 = arith.constant 1 : i32
    %0 = arith.muli %arg1, %c1_i32 : i32
    %1 = arith.addi %0, %arg2 : i32
    %c0_i32 = arith.constant 0 : i32
    %2 = arith.minsi %1, %c0_i32 : i32
    %c0_i32_0 = arith.constant 0 : i32
    %c0_i32_1 = arith.constant 0 : i32
    return %arg0, %c0_i32_0, %2 : i32, i32, i32
  }
  func.func @transform_2(%arg0: i32, %arg1: i32, %arg2: i32) -> (i32, i32, i32) {
    %c0_i32 = arith.constant 0 : i32
    %c0_i32_0 = arith.constant 0 : i32
    return %arg0, %arg1, %c0_i32 : i32, i32, i32
  }
}

</mosaic_0001>

<llo_original>
// kernel: tpu_custom_call.1
$region0: #{tpu_custom_call.1}
  #allocation0 [shape = 'u32[]', space=smem, size = 0x4, offset = 0x4, fixed_abs, tag = 'smem constant byte address 0x4 - core index']
  #allocation1 [shape = 'u32[72,128]{1,0:T(1,128)}', space=vmem, size = 0x9000, scoped, tag = 'internal scratch']
  #allocation2 [shape = 'f32[1,256]{1,0:T(1,128)}', space=vmem, size = 0x400, scoped, tag = 'scratch operand']
  %s0 = inlined_call_operand.hbm [shape: f32[2,4,256], index: 0, kind: input, shape index: {}]
  %s1 = inlined_call_operand.hbm [shape: s32[2,1,256], index: 1, kind: input, shape index: {}]
  %s2 = inlined_call_operand.hbm [shape: f32[2,1,128], index: 2, kind: output, shape index: {}]
  %s3 = sld [smem:[#allocation0]]
  $region57: #{tpu_custom_call.1} parent=0
    _
  %s5 = ssub.s32 1, %s3
  %s6 = scalar_select 0, %s5, %s3
  $region1: #{tpu_custom_call.1} parent=0
    #allocation3 [shape = 'u8[8192]{0}', space=vmem, size = 0x2000, scoped, tag = 'input window, operand 0']
    #allocation4 [shape = 's32[2]{0}', space=sflag, size = 0x8, scoped, tag = 'scoped memory for tpu_custom_call.1']
    #allocation5 [shape = 's32[2]{0}', space=sflag, size = 0x8, scoped, tag = 'scoped memory for tpu_custom_call.1']
    #allocation6 [shape = 'u8[2048]{0}', space=vmem, size = 0x800, scoped, tag = 'input window, operand 1']
    #allocation7 [shape = 's32[2]{0}', space=sflag, size = 0x8, scoped, tag = 'scoped memory for tpu_custom_call.1']
    #allocation8 [shape = 'u8[1024]{0}', space=vmem, size = 0x400, scoped, tag = 'output window, operand 0']
    %7 = vsyncpa [#allocation4], 0
    %s8 = scalar_lea.sflag [#allocation4], 1
    %9 = vsyncpa %s8, 0
    %10 = vsyncpa [#allocation7], 0
    %s11 = scalar_lea.sflag [#allocation7], 1
    %12 = vsyncpa %s11, 0
    %13 = vsyncpa [#allocation5], 0
    %s14 = scalar_lea.sflag [#allocation5], 1
    %15 = vsyncpa %s14, 0
    loop: start=0, step=1, limit=4
    $region2: #{tpu_custom_call.1} parent=1 // loop_pre_header
      _
    $region3: #{tpu_custom_call.1} parent=1 // loop_header
      %s17 = sphi 0, %s21
      %p18 = scmp.ge.s32.totalorder %s17, 4
      %s24 = sphi 0, %s43
      %s25 = sphi 0, %s39
      %s26 = sphi 0, %s35
      %s27 = sphi 0, %s24
      %s28 = sphi 0, %s25
      %s29 = sphi 0, %s26
      %s30 = sphi 0, %s27
      %s31 = sphi 0, %s28
      %s32 = sphi 0, %s29
      %s54 = sphi 0, %s56
      %s57 = sphi 0, %s54
      %s58 = sphi 0, %s57
      %s74 = sphi 0, %s58
      %s88 = sphi 0, %s90
      %s91 = sphi 0, %s88
      %s92 = sphi 0, %s91
      %s108 = sphi 0, %s92
      %s116 = sphi 0, %s118
      %s119 = sphi 0, %s116
      %s120 = sphi 0, %s119
      %s136 = sphi 0, %s120
    $region4: #{tpu_custom_call.1} parent=1 // loop_header_branch
      %20 = sbr.rel (%p18) target = $region8
    $region5: #{tpu_custom_call.1} parent=1 // loop_body
      %s22 = ssub.s32 %s17, 1
      %s23 = ssub.s32 %s17, 2
      %s33 = sadd.s32 1, %s26
      %p34 = scmp.ge.s32.totalorder %s33, 1
      %s35 = scalar_select %p34, 0, %s33
      %s36 = sadd.s32 1, %s25
      %s37 = scalar_select %p34, %s36, %s25
      %p38 = scmp.ge.s32.totalorder %s37, 1
      %s39 = scalar_select %p38, 0, %s37
      %s40 = sadd.s32 1, %s24
      %s41 = scalar_select %p38, %s40, %s24
      %p42 = scmp.ge.s32.totalorder %s41, 2
      %s43 = scalar_select %p42, 0, %s41
      %s44 = sadd.s32 %s25, %s26
      %p45 = scmp.lt.s32.totalorder %s44, 0
      %s46 = scalar_select %p45, %s44, 0
      %s47 = sadd.s32 %s39, %s35
      %p48 = scmp.lt.s32.totalorder %s47, 0
      %s49 = scalar_select %p48, %s47, 0
      %s50 = ssub.s32 %s24, %s43
      %s51 = ssub.s32 %s46, %s49
      %s52 = sor.u32 %s50, %s51
      %p53 = scmp.eq.s32.totalorder %s52, 0
      %s55 = sadd.s32 %s54, 1
      %s56 = scalar_select %p53, %s54, %s55
      %p59 = pneg %p53
      %p60 = scmp.eq.s32.totalorder %s17, 1
      %p61 = por %p59, %p60
      %p62 = scmp.ne.s32.totalorder %s54, %s57
      %p63 = scmp.eq.s32.totalorder %s17, 0
      %p64 = por %p62, %p63
      %p65 = scmp.ne.s32.totalorder %s54, %s57
      %p66 = scmp.eq.s32.totalorder %s22, 1
      %p67 = por %p65, %p66
      %p68 = scmp.ne.s32.totalorder %s57, %s58
      %p69 = scmp.eq.s32.totalorder %s22, 0
      %p70 = por %p68, %p69
      %p71 = scmp.ne.s32.totalorder %s57, %s58
      %p72 = scmp.eq.s32.totalorder %s23, 1
      %p73 = por %p71, %p72
      %p75 = scmp.ne.s32.totalorder %s58, %s74
      %p76 = scmp.eq.s32.totalorder %s23, 0
      %p77 = por %p75, %p76
      %s78 = sadd.s32 %s25, %s26
      %p79 = scmp.lt.s32.totalorder %s78, 0
      %s80 = scalar_select %p79, %s78, 0
      %s81 = sadd.s32 %s39, %s35
      %p82 = scmp.lt.s32.totalorder %s81, 0
      %s83 = scalar_select %p82, %s81, 0
      %s84 = ssub.s32 %s24, %s43
      %s85 = ssub.s32 %s80, %s83
      %s86 = sor.u32 %s84, %s85
      %p87 = scmp.eq.s32.totalorder %s86, 0
      %s89 = sadd.s32 %s88, 1
      %s90 = scalar_select %p87, %s88, %s89
      %p93 = pneg %p87
      %p94 = scmp.eq.s32.totalorder %s17, 1
      %p95 = por %p93, %p94
      %p96 = scmp.ne.s32.totalorder %s88, %s91
      %p97 = scmp.eq.s32.totalorder %s17, 0
      %p98 = por %p96, %p97
      %p99 = scmp.ne.s32.totalorder %s88, %s91
      %p100 = scmp.eq.s32.totalorder %s22, 1
      %p101 = por %p99, %p100
      %p102 = scmp.ne.s32.totalorder %s91, %s92
      %p103 = scmp.eq.s32.totalorder %s22, 0
      %p104 = por %p102, %p103
      %p105 = scmp.ne.s32.totalorder %s91, %s92
      %p106 = scmp.eq.s32.totalorder %s23, 1
      %p107 = por %p105, %p106
      %p109 = scmp.ne.s32.totalorder %s92, %s108
      %p110 = scmp.eq.s32.totalorder %s23, 0
      %p111 = por %p109, %p110
      %s112 = ssub.s32 %s24, %s43
      %s113 = ssub.s32 %s25, %s39
      %s114 = sor.u32 %s112, %s113
      %p115 = scmp.eq.s32.totalorder %s114, 0
      %s117 = sadd.s32 %s116, 1
      %s118 = scalar_select %p115, %s116, %s117
      %p121 = pneg %p115
      %p122 = scmp.eq.s32.totalorder %s17, 1
      %p123 = por %p121, %p122
      %p124 = scmp.ne.s32.totalorder %s116, %s119
      %p125 = scmp.eq.s32.totalorder %s17, 0
      %p126 = por %p124, %p125
      %p127 = scmp.ne.s32.totalorder %s116, %s119
      %p128 = scmp.eq.s32.totalorder %s22, 1
      %p129 = por %p127, %p128
      %p130 = scmp.ne.s32.totalorder %s119, %s120
      %p131 = scmp.eq.s32.totalorder %s22, 0
      %p132 = por %p130, %p131
      %p133 = scmp.ne.s32.totalorder %s119, %s120
      %p134 = scmp.eq.s32.totalorder %s23, 1
      %p135 = por %p133, %p134
      %p137 = scmp.ne.s32.totalorder %s120, %s136
      %p138 = scmp.eq.s32.totalorder %s23, 0
      %p139 = por %p137, %p138
      %p140 = scmp.le.s32.totalorder 1, %s17
      %p141 = scmp.lt.s32.totalorder %s17, 3
      %p142 = pnand %p140, %p141
      %p143 = pneg %p142
      // Predicated region
      $region9: #{tpu_custom_call.1} parent=5 // pred_check
        _
      $region10: #{tpu_custom_call.1} parent=5 // pred_check_branch
        %145 = sbr.rel (%p142) target = $region12
      $region11: #{tpu_custom_call.1} parent=5 // pred_region
        %s146 = ssub.s32 %s17, 1
      $region12: #{tpu_custom_call.1} parent=5 // pred_fallthru
        _
      %p147 = scmp.lt.s32.totalorder %s17, 2
      // Predicated region
      $region13: #{tpu_custom_call.1} parent=5 // pred_check
        %p148 = pneg %p147
      $region14: #{tpu_custom_call.1} parent=5 // pred_check_branch
        %150 = sbr.rel (%p148) target = $region16
      $region15: #{tpu_custom_call.1} parent=5 // pred_region
        // Predicated region
        $region17: #{tpu_custom_call.1} parent=15 // pred_check
          %p151 = pneg %p64
        $region18: #{tpu_custom_call.1} parent=15 // pred_check_branch
          %153 = sbr.rel (%p151) target = $region20
        $region19: #{tpu_custom_call.1} parent=15 // pred_region
          %s154 = sand.u32 %s54, 1
          %s155 = scalar_lea.sflag [#allocation4], %s154
          %s156 = sand.u32 %s54, 1
          %s157 = smul.addr %s156, 8
          %s158 = scalar_lea.vmem [#allocation3], %s157
          %s159 = sadd.s32 %s25, %s26
          %p160 = scmp.lt.s32.totalorder %s159, 0
          %s161 = scalar_select %p160, %s159, 0
          %s162 = smul.u32 2, %s161
          %164 = vsyncadd %s155, 0
          %s165 = smul.addr %s24, 2
          %s166 = sadd.s32 %s162, %s165
          %s167 = smul.addr %s166, 4
          %s168 = scalar_lea.hbm %s0, %s167
          %s170 = sshll.u32 %s168, 4
          %s171 = int_to_ptr.hbm [resolvable:$true] %s170
          %s172 = sshll.u32 %s158, 4
          %s173 = int_to_ptr.vmem [resolvable:$true] %s172
          %175 = dma.hbm_to_vmem [thread:$0]  %s171, 128, %s173, %s155
        $region20: #{tpu_custom_call.1} parent=15 // pred_fallthru
          _
        // Predicated region
        $region21: #{tpu_custom_call.1} parent=15 // pred_check
          %p176 = pneg %p98
        $region22: #{tpu_custom_call.1} parent=15 // pred_check_branch
          %178 = sbr.rel (%p176) target = $region24
        $region23: #{tpu_custom_call.1} parent=15 // pred_region
          %s179 = sand.u32 %s88, 1
          %s180 = scalar_lea.sflag [#allocation7], %s179
          %s181 = sand.u32 %s88, 1
          %s182 = smul.addr %s181, 2
          %s183 = scalar_lea.vmem [#allocation6], %s182
          %s184 = sadd.s32 %s25, %s26
          %p185 = scmp.lt.s32.totalorder %s184, 0
          %s186 = scalar_select %p185, %s184, 0
          %s187 = smul.u32 2, %s186
          %189 = vsyncadd %s180, 0
          %s190 = smul.addr %s24, 2
          %s191 = sadd.s32 %s187, %s190
          %s192 = scalar_lea.hbm %s1, %s191
          %s194 = sshll.u32 %s192, 4
          %s195 = int_to_ptr.hbm [resolvable:$true] %s194
          %s196 = sshll.u32 %s183, 4
          %s197 = int_to_ptr.vmem [resolvable:$true] %s196
          %199 = dma.hbm_to_vmem [thread:$0]  %s195, 32, %s197, %s180
        $region24: #{tpu_custom_call.1} parent=15 // pred_fallthru
          _
      $region16: #{tpu_custom_call.1} parent=5 // pred_fallthru
        _
      %p200 = scmp.le.s32.totalorder 1, %s17
      %p201 = scmp.lt.s32.totalorder %s17, 3
      %p202 = pnand %p200, %p201
      %p203 = pneg %p202
      // Predicated region
      $region25: #{tpu_custom_call.1} parent=5 // pred_check
        _
      $region26: #{tpu_custom_call.1} parent=5 // pred_check_branch
        %205 = sbr.rel (%p202) target = $region28
      $region27: #{tpu_custom_call.1} parent=5 // pred_region
        %s206 = ssub.s32 %s17, 1
        %s207 = sand.u32 %s57, 1
        %s208 = scalar_lea.sflag [#allocation4], %s207
        %s209 = sand.u32 %s57, 1
        %s210 = smul.addr %s209, 8
        %s211 = scalar_lea.vmem [#allocation3], %s210
        // Predicated region
        $region29: #{tpu_custom_call.1} parent=27 // pred_check
          %p212 = pneg %p70
        $region30: #{tpu_custom_call.1} parent=27 // pred_check_branch
          %214 = sbr.rel (%p212) target = $region32
        $region31: #{tpu_custom_call.1} parent=27 // pred_region
          %216 = dma.done %s208, 128
        $region32: #{tpu_custom_call.1} parent=27 // pred_fallthru
          _
        %s217 = sand.u32 %s91, 1
        %s218 = scalar_lea.sflag [#allocation7], %s217
        %s219 = sand.u32 %s91, 1
        %s220 = smul.addr %s219, 2
        %s221 = scalar_lea.vmem [#allocation6], %s220
        // Predicated region
        $region33: #{tpu_custom_call.1} parent=27 // pred_check
          %p222 = pneg %p104
        $region34: #{tpu_custom_call.1} parent=27 // pred_check_branch
          %224 = sbr.rel (%p222) target = $region36
        $region35: #{tpu_custom_call.1} parent=27 // pred_region
          %226 = dma.done %s218, 32
        $region36: #{tpu_custom_call.1} parent=27 // pred_fallthru
          _
        %s227 = sand.u32 %s57, 1
        %s228 = scalar_lea.sflag [#allocation4], %s227
        %s229 = sand.u32 %s57, 1
        %s230 = smul.addr %s229, 8
        %s231 = scalar_lea.vmem [#allocation3], %s230
        %p232 = pneg %p70
        %p233 = pneg %p67
        %s234 = sand.u32 %s91, 1
        %s235 = scalar_lea.sflag [#allocation7], %s234
        %s236 = sand.u32 %s91, 1
        %s237 = smul.addr %s236, 2
        %s238 = scalar_lea.vmem [#allocation6], %s237
        %p239 = pneg %p104
        %p240 = pneg %p101
        %p241 = pneg %p132
        %p242 = pneg %p129
        %s243 = sand.u32 %s119, 1
        %s244 = scalar_lea.sflag [#allocation5], %s243
        %s245 = sand.u32 %s119, 1
        %s246 = scalar_lea.vmem [#allocation8], %s245
        %s247 = sadd.s32 %s28, %s29
        %p248 = scmp.lt.s32.totalorder %s247, 0
        %s249 = scalar_select %p248, %s247, 0
        %s250 = smul.u32 2, %s249
        %s251 = sadd.s32 %s28, %s29
        %p252 = scmp.lt.s32.totalorder %s251, 0
        %s253 = scalar_select %p252, %s251, 0
        %s254 = smul.u32 2, %s253
        %p255 = scmp.eq.s32.totalorder %s29, 0
        // Predicated region
        $region37: #{tpu_custom_call.1} parent=27 // pred_check
          %p256 = pneg %p255
        $region38: #{tpu_custom_call.1} parent=27 // pred_check_branch
          %258 = sbr.rel (%p256) target = $region40
        $region39: #{tpu_custom_call.1} parent=27 // pred_region
          %v259 = vlaneseq
          %vm260 = vcmp.ge.s32.totalorder %v259, 0
          %vm261 = vcmp.lt.s32.totalorder %v259, 256
          %vm262 = vmand %vm260, %vm261
          %263 = vst.msk [vmem:[#allocation2] sm:$0x3] %vm262, 0.0
        $region40: #{tpu_custom_call.1} parent=27 // pred_fallthru
          _
        %v264 = vld [vmem:[%s211] sm:$0xff]
        %v265 = vld [vmem:[%s221] sm:$0x3]
        %vm266 = vcmp.ne.s32.totalorder %v265, 4294967196
        %v267 = vsel %vm266, 1, 0
        %v268 = vmul.u32 %v265, %v267
        %270 = vst [vmem:[#allocation1] ss:$2 sm:$0xff] %v264
        %v271 = vld.sshfl [vmem:[#allocation1] sm:$0xff pattern:$0x75316420]
        %v272 = vld.sshfl [vmem:[#allocation1 + $0x8] sm:$0xff pattern:$0x75316420]
        %vm275 = vcmask 1043456
        %v276 = vsel %vm275, %v271, -inf
        %v277 = vrot.slane %v276, 4
        %v278 = vmax.f32 %v276, %v277
        %v279 = vrot.slane %v278, 2
        %v280 = vmax.f32 %v278, %v279
        %v281 = vrot.slane %v280, 1
        %v282 = vmax.f32 %v280, %v281
        %v283 = vsel %vm275, %v272, -inf
        %v284 = vrot.slane %v283, 4
        %v285 = vmax.f32 %v283, %v284
        %v286 = vrot.slane %v285, 2
        %v287 = vmax.f32 %v285, %v286
        %v288 = vrot.slane %v287, 1
        %v289 = vmax.f32 %v287, %v288
        %v292 = vrot.slane %v289, 4
        %v293 = vsel %vm275, %v282, %v292
        %v295 = vsub.f32 %v264, %v293
        %v296 = vmul.f32 %v295, 1.442695
        %v297 = vpow.pop %v296
        %299 = vst [vmem:[#allocation1] ss:$2 sm:$0xff] %v297
        %v300 = vld.sshfl [vmem:[#allocation1] sm:$0xff pattern:$0x75316420]
        %v301 = vld.sshfl [vmem:[#allocation1 + $0x8] sm:$0xff pattern:$0x75316420]
        %v304 = vsel %vm275, %v300, 0.0
        %v305 = vrot.slane %v304, 4
        %v306 = vadd.f32 %v304, %v305
        %v307 = vrot.slane %v306, 2
        %v308 = vadd.f32 %v306, %v307
        %v309 = vrot.slane %v308, 1
        %v310 = vadd.f32 %v308, %v309
        %v311 = vsel %vm275, %v301, 0.0
        %v312 = vrot.slane %v311, 4
        %v313 = vadd.f32 %v311, %v312
        %v314 = vrot.slane %v313, 2
        %v315 = vadd.f32 %v313, %v314
        %v316 = vrot.slane %v315, 1
        %v317 = vadd.f32 %v315, %v316
        %v318 = vlog2.pop %v310
        %v319 = vmul.f32 %v318, 0.6931472
        %v320 = vlog2.pop %v317
        %v321 = vmul.f32 %v320, 0.6931472
        %v322 = vadd.f32 %v282, %v319
        %v323 = vadd.f32 %v289, %v321
        %v324 = vlaneseq
        %v325 = vshrl.u32 %v324, 7
        %v326 = vperm.slane %v268, 0
        %v327 = vperm.slane %v268, 1
        %vm328 = vcmp.eq.s32.totalorder %v325, %v326
        %vm329 = vcmp.eq.s32.totalorder %v325, %v327
        %330 = vst [vmem:[#allocation1] ss:$2 sm:$0xff] %v264
        %v331 = vld.sshfl [vmem:[#allocation1] sm:$0xff pattern:$0x75316420]
        %v332 = vld.sshfl [vmem:[#allocation1 + $0x8] sm:$0xff pattern:$0x75316420]
        %v335 = vsel %vm328, %v331, 0.0
        %v336 = vsel %vm329, %v332, 0.0
        %v337 = vsel %vm275, %v335, 0.0
        %v338 = vrot.slane %v337, 4
        %v339 = vadd.f32 %v337, %v338
        %v340 = vrot.slane %v339, 2
        %v341 = vadd.f32 %v339, %v340
        %v342 = vrot.slane %v341, 1
        %v343 = vadd.f32 %v341, %v342
        %v344 = vsel %vm275, %v336, 0.0
        %v345 = vrot.slane %v344, 4
        %v346 = vadd.f32 %v344, %v345
        %v347 = vrot.slane %v346, 2
        %v348 = vadd.f32 %v346, %v347
        %v349 = vrot.slane %v348, 1
        %v350 = vadd.f32 %v348, %v349
        %v351 = vsub.f32 %v343, %v322
        %v352 = vsub.f32 %v350, %v323
        %v353 = vmul.f32 %v351, 1.442695
        %v354 = vpow.pop %v353
        %v355 = vmul.f32 %v352, 1.442695
        %v356 = vpow.pop %v355
        %v357 = vsub.f32 1.0, %v354
        %v358 = vsub.f32 1.0, %v356
        %v359 = vmul.f32 %v357, %v357
        %v360 = vmul.f32 %v358, %v358
        %v361 = vsub.f32 0.0, %v359
        %v362 = vsub.f32 0.0, %v360
        %v363 = vmul.f32 %v361, %v351
        %v364 = vmul.f32 %v362, %v352
        %v365 = vld [vmem:[#allocation2] sm:$0x3]
        %v368 = vrot.slane %v364, 7
        %vm369 = vcmask 1040384
        %v370 = vsel %vm369, %v363, %v368
        %v372 = vadd.f32 %v365, %v370
        %v373 = vlaneseq
        %vm374 = vcmp.ge.s32.totalorder %v373, 0
        %vm375 = vcmp.lt.s32.totalorder %v373, 256
        %vm376 = vmand %vm374, %vm375
        %377 = vst.msk [vmem:[#allocation2] sm:$0x3] %vm376, %v372
        // Predicated region
        $region41: #{tpu_custom_call.1} parent=27 // pred_check
          %p378 = pneg %p255
        $region42: #{tpu_custom_call.1} parent=27 // pred_check_branch
          %380 = sbr.rel (%p378) target = $region44
        $region43: #{tpu_custom_call.1} parent=27 // pred_region
          %v381 = vld [vmem:[#allocation2] sm:$0x3]
          %v383 = vrot.slane %v381, 1
          %v385 = vadd.f32 %v381, %v383
          %386 = vst [vmem:[%s246] sm:$0x1] %v385
        $region44: #{tpu_custom_call.1} parent=27 // pred_fallthru
          _
        %s387 = sand.u32 %s119, 1
        %s388 = scalar_lea.sflag [#allocation5], %s387
        %s389 = sand.u32 %s119, 1
        %s390 = scalar_lea.vmem [#allocation8], %s389
        // Predicated region
        $region45: #{tpu_custom_call.1} parent=27 // pred_check
          %p391 = pneg %p129
        $region46: #{tpu_custom_call.1} parent=27 // pred_check_branch
          %393 = sbr.rel (%p391) target = $region48
        $region47: #{tpu_custom_call.1} parent=27 // pred_region
          %395 = vsyncadd %s388, 0
          %s396 = sadd.s32 %s28, %s27
          %s397 = scalar_lea.hbm %s2, %s396
          %s399 = sshll.u32 %s390, 4
          %s400 = int_to_ptr.vmem [resolvable:$true] %s399
          %s401 = sshll.u32 %s397, 4
          %s402 = int_to_ptr.hbm [resolvable:$true] %s401
          %404 = dma.vmem_to_hbm [thread:$0]  %s400, 16, %s402, %s388
        $region48: #{tpu_custom_call.1} parent=27 // pred_fallthru
          _
      $region28: #{tpu_custom_call.1} parent=5 // pred_fallthru
        _
      %p405 = scmp.le.s32.totalorder 2, %s17
      // Predicated region
      $region49: #{tpu_custom_call.1} parent=5 // pred_check
        %p406 = pneg %p405
      $region50: #{tpu_custom_call.1} parent=5 // pred_check_branch
        %408 = sbr.rel (%p406) target = $region52
      $region51: #{tpu_custom_call.1} parent=5 // pred_region
        %s409 = ssub.s32 %s17, 2
        // Predicated region
        $region53: #{tpu_custom_call.1} parent=51 // pred_check
          %p410 = pneg %p135
        $region54: #{tpu_custom_call.1} parent=51 // pred_check_branch
          %412 = sbr.rel (%p410) target = $region56
        $region55: #{tpu_custom_call.1} parent=51 // pred_region
          %s413 = sand.u32 %s120, 1
          %s414 = scalar_lea.sflag [#allocation5], %s413
          %s415 = sand.u32 %s120, 1
          %s416 = scalar_lea.vmem [#allocation8], %s415
          %418 = dma.done %s414, 16
        $region56: #{tpu_custom_call.1} parent=51 // pred_fallthru
          _
      $region52: #{tpu_custom_call.1} parent=5 // pred_fallthru
        _
    $region6: #{tpu_custom_call.1} parent=1 // loop_footer
      %s21 = sadd.s32 1, %s17
    $region7: #{tpu_custom_call.1} parent=1 // loop_footer_branch
      %16 = sbr.rel target = $region3
    $region8: #{tpu_custom_call.1} parent=1 // loop_exit
      _
    %419 = vsyncpa [#allocation4], 1
    %s420 = scalar_lea.sflag [#allocation4], 1
    %421 = vsyncpa %s420, 1
    %422 = vsyncpa [#allocation7], 1
    %s423 = scalar_lea.sflag [#allocation7], 1
    %424 = vsyncpa %s423, 1
    %425 = vsyncpa [#allocation5], 1
    %s426 = scalar_lea.sflag [#allocation5], 1
    %427 = vsyncpa %s426, 1

</llo_original>
